<compile_context>
chip_gen: v6e
topology: v6e:2x2x1
jax: 0.10.0
libtpu: 0.0.40
codegen_flags: <defaults>
</compile_context>

<pallas_src>
import functools

import jax
import jax.numpy as jnp
from jax.experimental import pallas as pl
from jax.experimental.pallas import tpu as pltpu


# ---------------------------------------------------------------------------
# Small helpers
# ---------------------------------------------------------------------------
def _cdiv(a, b):
    return -(-a // b)


def _round_up(a, m):
    return _cdiv(a, m) * m


def _pad2d(a, rows, cols):
    return jnp.pad(a, ((0, rows - a.shape[0]), (0, cols - a.shape[1])))


def _vmem_budget_bytes():
    """Generation-aware VMEM budget (headroom under the physical per-core limit)."""
    cap = None
    try:
        info = pltpu.get_tpu_info()
        for name in ("vmem_capacity_bytes", "vmem_size_bytes", "vmem_bytes"):
            v = getattr(info, name, None)
            if isinstance(v, (int, float)) and v > 0:
                cap = int(v)
                break
    except Exception:
        cap = None
    if cap is None:
        cap = 64 * 1024 * 1024          # conservative: v7x physical VMEM per TC
    return int(min(cap * 3 // 4, 112 * 1024 * 1024))


def _ce(flops, bytes_accessed):
    return pl.CostEstimate(flops=int(flops), transcendentals=0,
                           bytes_accessed=int(bytes_accessed))


# ---------------------------------------------------------------------------
# Fused single-call kernel (small-problem fast path, everything VMEM-resident)
#   out = DVHW @ (EHD @ (relu(DVHW @ (EHD @ (x@th1+b1))) @ th2 + b2))
# ---------------------------------------------------------------------------
def _fused_kernel(x_ref, dvhw_ref, ehd_ref, th1_ref, b1_ref, th2_ref, b2_ref,
                  out_ref, *, cd):
    ehd = ehd_ref[...]
    dvhw = dvhw_ref[...]
    t1 = jnp.dot(x_ref[...], th1_ref[...],
                 preferred_element_type=jnp.float32) + b1_ref[...]
    z1 = jnp.dot(ehd, t1.astype(cd), preferred_element_type=jnp.float32)
    y1 = jnp.maximum(jnp.dot(dvhw, z1.astype(cd),
                             preferred_element_type=jnp.float32), 0.0)
    # dropout(p=0.0) is the identity.
    t2 = jnp.dot(y1.astype(cd), th2_ref[...],
                 preferred_element_type=jnp.float32) + b2_ref[...]
    z2 = jnp.dot(ehd, t2.astype(cd), preferred_element_type=jnp.float32)
    out_ref[...] = jnp.dot(dvhw, z2.astype(cd),
                           preferred_element_type=jnp.float32)


# ---------------------------------------------------------------------------
# Pass 1 (stream row tiles, reduce over the inner grid axis):
#   z1[split] += invDE_HT_DV2[:, tile] @ (x_tile @ theta1 + b1)     (E, h_pad)
# ---------------------------------------------------------------------------
def _pass1_kernel(x_ref, ehd_ref, th1_ref, b1_ref, z1_ref, *, cd):
    @pl.when(pl.program_id(1) == 0)
    def _():
        z1_ref[...] = jnp.zeros_like(z1_ref)

    t = jnp.dot(x_ref[...], th1_ref[...],
                preferred_element_type=jnp.float32) + b1_ref[...]
    z1_ref[...] += jnp.dot(ehd_ref[...], t.astype(cd),
                           preferred_element_type=jnp.float32)[None]


# ---------------------------------------------------------------------------
# Pass 2 (stream row tiles, reduce over the inner grid axis):
#   y1_tile = relu(DVHW_tile @ z1)                (never written to HBM)
#   z2[split] += invDE_HT_DV2[:, tile] @ (y1_tile @ theta2 + b2)    (E, c_pad)
# ---------------------------------------------------------------------------
def _pass2_kernel(dvhw_ref, ehd_ref, z1_ref, th2_ref, b2_ref, z2_ref, *, cd):
    @pl.when(pl.program_id(1) == 0)
    def _():
        z2_ref[...] = jnp.zeros_like(z2_ref)

    y1 = jnp.maximum(jnp.dot(dvhw_ref[...], z1_ref[...],
                             preferred_element_type=jnp.float32), 0.0)
    t2 = jnp.dot(y1.astype(cd), th2_ref[...],
                 preferred_element_type=jnp.float32) + b2_ref[...]
    z2_ref[...] += jnp.dot(ehd_ref[...], t2.astype(cd),
                           preferred_element_type=jnp.float32)[None]


# ---------------------------------------------------------------------------
# Pass 3 (embarrassingly parallel over row tiles):
#   out_tile = DVHW_tile @ z2
# ---------------------------------------------------------------------------
def _pass3_kernel(dvhw_ref, z2_ref, out_ref):
    out_ref[...] = jnp.dot(dvhw_ref[...], z2_ref[...],
                           preferred_element_type=jnp.float32)


# ---------------------------------------------------------------------------
# Wrapper
# ---------------------------------------------------------------------------
def hgnn_weight_forward(x, DV2_H_invDE, invDE_HT_DV2, H, params, *,
                        block_rows=512, compute_dtype=jnp.bfloat16,
                        allow_fused=True):
    """Returns (x_out, HW, W, w2) matching HGNN_weight.forward."""
    W, th1, b1, th2, b2 = (params["W"], params["theta1"], params["bias1"],
                           params["theta2"], params["bias2"])
    N, in_ch = x.shape
    E = H.shape[1]
    n_hid = th1.shape[1]
    n_class = th2.shape[1]
    cd = compute_dtype
    bcd = jnp.dtype(cd).itemsize

    # --- Exact, cheap ops left to XLA (perf review: keep them out of pass 1) ---
    HW = H * W[None, :]                       # H @ diag(W), exact f32
    DVHW = DV2_H_invDE * W[None, :]           # fold diag(W) into DVH once, f32

    # --- Lane-dense padding (zero-filled => results exact after slicing) ---
    e_pad = _round_up(E, 128)
    h_pad = _round_up(n_hid, 128)
    c_pad = _round_up(n_class, 128)

    th1_p = _pad2d(th1, in_ch, h_pad).astype(cd)
    b1_p = _pad2d(b1.reshape(1, n_hid), 1, h_pad)          # f32 (added post-MXU)
    th2_p = _pad2d(th2, h_pad, c_pad).astype(cd)
    b2_p = _pad2d(b2.reshape(1, n_class), 1, c_pad)         # f32

    budget = _vmem_budget_bytes()

    # ---------------- Small-problem fused fast path ----------------
    n_full = _round_up(N, 128)
    fused_est = (2 * bcd * n_full * (in_ch + 2 * e_pad) * 2          # x, dvhw, ehd (x2 buf)
                 + 2 * 4 * n_full * c_pad                            # out (x2 buf)
                 + 4 * (n_full * h_pad + e_pad * (h_pad + c_pad))    # intermediates
                 + 2 * (bcd * (in_ch * h_pad + h_pad * c_pad) + 4 * (h_pad + c_pad)))
    if allow_fused and fused_est <= budget // 2:
        x_p = _pad2d(x, n_full, in_ch).astype(cd)
        dvhw_p = _pad2d(DVHW, n_full, e_pad).astype(cd)
        ehd_p = _pad2d(invDE_HT_DV2, e_pad, n_full).astype(cd)

        flops = 2 * n_full * (in_ch * h_pad + 2 * e_pad * h_pad
                              + h_pad * c_pad + 2 * e_pad * c_pad)
        bytes_acc = bcd * (n_full * in_ch + 2 * n_full * e_pad
                           + in_ch * h_pad + h_pad * c_pad) + 4 * n_full * c_pad

        out_p = pl.pallas_call(
            functools.partial(_fused_kernel, cd=cd),
            grid=(1,),
            in_specs=[
                pl.BlockSpec((n_full, in_ch), lambda i: (0, 0)),
                pl.BlockSpec((n_full, e_pad), lambda i: (0, 0)),
                pl.BlockSpec((e_pad, n_full), lambda i: (0, 0)),
                pl.BlockSpec((in_ch, h_pad), lambda i: (0, 0)),
                pl.BlockSpec((1, h_pad), lambda i: (0, 0)),
                pl.BlockSpec((h_pad, c_pad), lambda i: (0, 0)),
                pl.BlockSpec((1, c_pad), lambda i: (0, 0)),
            ],
            out_specs=pl.BlockSpec((n_full, c_pad), lambda i: (0, 0)),
            out_shape=jax.ShapeDtypeStruct((n_full, c_pad), jnp.float32),
            compiler_params=pltpu.CompilerParams(
                dimension_semantics=("arbitrary",), vmem_limit_bytes=budget),
            cost_estimate=_ce(flops, bytes_acc),
        )(x_p, dvhw_p, ehd_p, th1_p, b1_p, th2_p, b2_p)
        return out_p[:N, :n_class], HW, W, th1

    # ---------------- Streaming three-pass path ----------------
    # Row-tile size: cap by VMEM budget (pass-2 streams dominate), minimize padding.
    resident = 2 * 4 * (e_pad * h_pad + h_pad * c_pad + e_pad * c_pad
                        + h_pad + c_pad) + (1 << 20)
    coef = max(2 * bcd * (in_ch + e_pad),          # pass 1: x + ehd, double-buffered
               4 * bcd * e_pad,                    # pass 2: dvhw + ehd, double-buffered
               2 * bcd * e_pad + 8 * c_pad)        # pass 3: dvhw + f32 out
    tm_cap = max(128, ((budget - resident) // coef) // 128 * 128)

    tm0 = max(128, min(_round_up(block_rows, 128), tm_cap))
    n_tiles = _cdiv(N, tm0)
    num_splits = 2 if n_tiles >= 2 else 1          # v7x: one split per TensorCore
    n_tiles = _round_up(n_tiles, num_splits)
    tm = max(128, min(tm0, _round_up(_cdiv(N, n_tiles), 128)))
    n_tiles = _round_up(_cdiv(N, tm), num_splits)
    n_pad = n_tiles * tm
    tps = n_tiles // num_splits                    # row tiles per split

    x_p = _pad2d(x, n_pad, in_ch).astype(cd)
    dvhw_p = _pad2d(DVHW, n_pad, e_pad).astype(cd)
    ehd_p = _pad2d(invDE_HT_DV2, e_pad, n_pad).astype(cd)

    cp_reduce = pltpu.CompilerParams(
        dimension_semantics=("parallel", "arbitrary"), vmem_limit_bytes=budget)
    cp_parallel = pltpu.CompilerParams(
        dimension_semantics=("parallel",), vmem_limit_bytes=budget)

    # ---- Pass 1: z1 = invDE_HT_DV2 @ (x @ theta1 + b1), split-partials ----
    z1_parts = pl.pallas_call(
        functools.partial(_pass1_kernel, cd=cd),
        grid=(num_splits, tps),
        in_specs=[
            pl.BlockSpec((tm, in_ch), lambda c, i: (c * tps + i, 0)),
            pl.BlockSpec((e_pad, tm), lambda c, i: (0, c * tps + i)),
            pl.BlockSpec((in_ch, h_pad), lambda c, i: (0, 0)),
            pl.BlockSpec((1, h_pad), lambda c, i: (0, 0)),
        ],
        out_specs=pl.BlockSpec((1, e_pad, h_pad), lambda c, i: (c, 0, 0)),
        out_shape=jax.ShapeDtypeStruct((num_splits, e_pad, h_pad), jnp.float32),
        compiler_params=cp_reduce,
        cost_estimate=_ce(2 * n_pad * h_pad * (in_ch + e_pad),
                          bcd * (n_pad * in_ch + e_pad * n_pad + in_ch * h_pad)
                          + 4 * (h_pad + num_splits * e_pad * h_pad)),
    )(x_p, ehd_p, th1_p, b1_p)
    z1 = z1_parts.sum(axis=0).astype(cd)

    # ---- Pass 2: z2 = invDE_HT_DV2 @ (relu(DVHW @ z1) @ theta2 + b2) ----
    z2_parts = pl.pallas_call(
        functools.partial(_pass2_kernel, cd=cd),
        grid=(num_splits, tps),
        in_specs=[
            pl.BlockSpec((tm, e_pad), lambda c, i: (c * tps + i, 0)),
            pl.BlockSpec((e_pad, tm), lambda c, i: (0, c * tps + i)),
            pl.BlockSpec((e_pad, h_pad), lambda c, i: (0, 0)),
            pl.BlockSpec((h_pad, c_pad), lambda c, i: (0, 0)),
            pl.BlockSpec((1, c_pad), lambda c, i: (0, 0)),
        ],
        out_specs=pl.BlockSpec((1, e_pad, c_pad), lambda c, i: (c, 0, 0)),
        out_shape=jax.ShapeDtypeStruct((num_splits, e_pad, c_pad), jnp.float32),
        compiler_params=cp_reduce,
        cost_estimate=_ce(2 * n_pad * (e_pad * h_pad + h_pad * c_pad + e_pad * c_pad),
                          bcd * (2 * n_pad * e_pad + e_pad * h_pad + h_pad * c_pad)
                          + 4 * (c_pad + num_splits * e_pad * c_pad)),
    )(dvhw_p, ehd_p, z1, th2_p, b2_p)
    z2 = z2_parts.sum(axis=0).astype(cd)

    # ---- Pass 3: out = DVHW @ z2  (row-parallel, lane-dense f32 stores) ----
    out_p = pl.pallas_call(
        _pass3_kernel,
        grid=(n_tiles,),
        in_specs=[
            pl.BlockSpec((tm, e_pad), lambda i: (i, 0)),
            pl.BlockSpec((e_pad, c_pad), lambda i: (0, 0)),
        ],
        out_specs=pl.BlockSpec((tm, c_pad), lambda i: (i, 0)),
        out_shape=jax.ShapeDtypeStruct((n_pad, c_pad), jnp.float32),
        compiler_params=cp_parallel,
        cost_estimate=_ce(2 * n_pad * e_pad * c_pad,
                          bcd * (n_pad * e_pad + e_pad * c_pad) + 4 * n_pad * c_pad),
    )(dvhw_p, z2)

    return out_p[:N, :n_class], HW, W, th1


# ---------------------------------------------------------------------------
# Pure-JAX reference (mirrors the PyTorch module) and test utilities
# ---------------------------------------------------------------------------
def _reference(x, DV2_H_invDE, invDE_HT_DV2, H, params):
    W, th1, b1, th2, b2 = (params["W"], params["theta1"], params["bias1"],
                           params["theta2"], params["bias2"])
    G = (DV2_H_invDE * W[None, :]) @ invDE_HT_DV2
    HW = H * W[None, :]
    x1 = jnp.maximum(G @ (x @ th1 + b1[None, :]), 0.0)
    x2 = G @ (x1 @ th2 + b2[None, :])
    return x2, HW, W, th1


def _make_problem(key, N, E, in_ch, n_hid, n_class):
    kx, kh, kw, k1, kb1, k2, kb2 = jax.random.split(key, 7)
    x = jax.random.normal(kx, (N, in_ch), dtype=jnp.float32)
    H = (jax.random.uniform(kh, (N, E)) > 0.5).astype(jnp.float32)
    DV = H.sum(axis=1) + 1.0
    DE = H.sum(axis=0) + 1.0
    DV2 = 1.0 / jnp.sqrt(DV)                                 # diag(DV^{-1/2})
    invDE = 1.0 / DE                                         # diag(DE^{-1})
    DV2_H_invDE = (DV2[:, None] * H) * invDE[None, :]        # (N, E)
    invDE_HT_DV2 = (invDE[:, None] * H.T) * DV2[None, :]     # (E, N)
    params = {
        "W": jax.random.uniform(kw, (E,), dtype=jnp.float32),
        "theta1": jax.random.normal(k1, (in_ch, n_hid), jnp.float32) * 0.1,
        "bias1": jax.random.normal(kb1, (n_hid,), jnp.float32) * 0.1,
        "theta2": jax.random.normal(k2, (n_hid, n_class), jnp.float32) * 0.1,
        "bias2": jax.random.normal(kb2, (n_class,), jnp.float32) * 0.1,
    }
    return x, DV2_H_invDE, invDE_HT_DV2, H, params


def _check_outputs(outs, refs, x_tol):
    x_o, hw_o, w_o, th_o = outs
    x_r, hw_r, w_r, th_r = refs
    assert x_o.shape == x_r.shape
    assert bool(jnp.all(jnp.isfinite(x_o)))
    err = float(jnp.max(jnp.abs(x_o - x_r)))
    scale = 1.0 + float(jnp.max(jnp.abs(x_r)))
    assert err <= x_tol * scale, (err, x_tol * scale)
    assert hw_o.shape == hw_r.shape
    assert bool(jnp.allclose(hw_o, hw_r, atol=1e-6, rtol=1e-6))
    assert bool(jnp.array_equal(w_o, w_r))
    assert bool(jnp.array_equal(th_o, th_r))


if __name__ == "__main__":
    key = jax.random.PRNGKey(0)
    key1, key2 = jax.random.split(key)

    # --- Case 1: small problem -> fused single-call fast path (grid=(1,)) ---
    prob1 = _make_problem(key1, N=16, E=8, in_ch=32, n_hid=32, n_class=4)
    refs1 = _reference(*prob1)

    outs1_f32 = jax.block_until_ready(
        hgnn_weight_forward(*prob1, compute_dtype=jnp.float32))
    _check_outputs(outs1_f32, refs1, x_tol=1e-4)

    outs1_bf16 = jax.block_until_ready(hgnn_weight_forward(*prob1))
    _check_outputs(outs1_bf16, refs1, x_tol=5e-2)

    # --- Case 2: multi-tile streaming path (4 row tiles, 2-way split,
    #             cross-tile accumulation, row-padding remainder) ---
    prob2 = _make_problem(key2, N=300, E=40, in_ch=24, n_hid=48, n_class=6)
    refs2 = _reference(*prob2)

    outs2_f32 = jax.block_until_ready(
        hgnn_weight_forward(*prob2, compute_dtype=jnp.float32,
                            block_rows=128, allow_fused=False))
    _check_outputs(outs2_f32, refs2, x_tol=1e-4)

    outs2_bf16 = jax.block_until_ready(
        hgnn_weight_forward(*prob2, block_rows=128, allow_fused=False))
    _check_outputs(outs2_bf16, refs2, x_tol=5e-2)

    print("KERNEL_OK")
</pallas_src>

<mosaic_0001>
module attributes {stable_mosaic.version = 11 : i64} {
  func.func @_fused_kernel(%arg0: i32, %arg1: memref<128x32xf32, #tpu.memory_space<vmem>>, %arg2: memref<128x128xf32, #tpu.memory_space<vmem>>, %arg3: memref<128x128xf32, #tpu.memory_space<vmem>>, %arg4: memref<32x128xf32, #tpu.memory_space<vmem>>, %arg5: memref<1x128xf32, #tpu.memory_space<vmem>>, %arg6: memref<128x128xf32, #tpu.memory_space<vmem>>, %arg7: memref<1x128xf32, #tpu.memory_space<vmem>>, %arg8: memref<128x128xf32, #tpu.memory_space<vmem>>) attributes {dimension_semantics = [#tpu.dimension_semantics<arbitrary>], iteration_bounds = array<i64: 1>, scalar_prefetch = 0 : i64, scratch_operands = 0 : i64, tpu.core_type = #tpu.core_type<tc>, window_params = [{pipeline_mode = #tpu.pipeline_mode<synchronous>, transform_indices = @transform_0, window_bounds = array<i64: 128, 32>}, {pipeline_mode = #tpu.pipeline_mode<synchronous>, transform_indices = @transform_1, window_bounds = array<i64: 128, 128>}, {pipeline_mode = #tpu.pipeline_mode<synchronous>, transform_indices = @transform_2, window_bounds = array<i64: 128, 128>}, {pipeline_mode = #tpu.pipeline_mode<synchronous>, transform_indices = @transform_3, window_bounds = array<i64: 32, 128>}, {pipeline_mode = #tpu.pipeline_mode<synchronous>, transform_indices = @transform_4, window_bounds = array<i64: 1, 128>}, {pipeline_mode = #tpu.pipeline_mode<synchronous>, transform_indices = @transform_5, window_bounds = array<i64: 128, 128>}, {pipeline_mode = #tpu.pipeline_mode<synchronous>, transform_indices = @transform_6, window_bounds = array<i64: 1, 128>}, {pipeline_mode = #tpu.pipeline_mode<synchronous>, transform_indices = @transform_7, window_bounds = array<i64: 128, 128>}]} {
    %c0 = arith.constant 0 : index
    %c0_0 = arith.constant 0 : index
    %0 = vector.load %arg3[%c0, %c0_0] : memref<128x128xf32, #tpu.memory_space<vmem>>, vector<128x128xf32>
    %c0_1 = arith.constant 0 : index
    %c0_2 = arith.constant 0 : index
    %1 = vector.load %arg2[%c0_1, %c0_2] : memref<128x128xf32, #tpu.memory_space<vmem>>, vector<128x128xf32>
    %c0_3 = arith.constant 0 : index
    %c0_4 = arith.constant 0 : index
    %2 = vector.load %arg1[%c0_3, %c0_4] : memref<128x32xf32, #tpu.memory_space<vmem>>, vector<128x32xf32>
    %c0_5 = arith.constant 0 : index
    %c0_6 = arith.constant 0 : index
    %3 = vector.load %arg4[%c0_5, %c0_6] : memref<32x128xf32, #tpu.memory_space<vmem>>, vector<32x128xf32>
    %cst = arith.constant dense<0.000000e+00> : vector<128x128xf32>
    %4 = tpu.matmul %2, %3, %cst {dimension_numbers = #tpu.dot_dimension_numbers<[1], [0], [0], [1], [0, 0, 1, 1], [], []>} : vector<128x32xf32>, vector<32x128xf32>, vector<128x128xf32> -> vector<128x128xf32>
    %c0_7 = arith.constant 0 : index
    %c0_8 = arith.constant 0 : index
    %5 = vector.load %arg5[%c0_7, %c0_8] : memref<1x128xf32, #tpu.memory_space<vmem>>, vector<1x128xf32>
    %6 = vector.broadcast %5 : vector<1x128xf32> to vector<128x128xf32>
    %7 = arith.addf %4, %6 : vector<128x128xf32>
    %cst_9 = arith.constant dense<0.000000e+00> : vector<128x128xf32>
    %8 = tpu.matmul %0, %7, %cst_9 {dimension_numbers = #tpu.dot_dimension_numbers<[1], [0], [0], [1], [0, 0, 1, 1], [], []>} : vector<128x128xf32>, vector<128x128xf32>, vector<128x128xf32> -> vector<128x128xf32>
    %cst_10 = arith.constant dense<0.000000e+00> : vector<128x128xf32>
    %9 = tpu.matmul %1, %8, %cst_10 {dimension_numbers = #tpu.dot_dimension_numbers<[1], [0], [0], [1], [0, 0, 1, 1], [], []>} : vector<128x128xf32>, vector<128x128xf32>, vector<128x128xf32> -> vector<128x128xf32>
    %cst_11 = arith.constant 0.000000e+00 : f32
    %10 = vector.broadcast %cst_11 : f32 to vector<128x128xf32>
    %11 = arith.maximumf %9, %10 : vector<128x128xf32>
    %c0_12 = arith.constant 0 : index
    %c0_13 = arith.constant 0 : index
    %12 = vector.load %arg6[%c0_12, %c0_13] : memref<128x128xf32, #tpu.memory_space<vmem>>, vector<128x128xf32>
    %cst_14 = arith.constant dense<0.000000e+00> : vector<128x128xf32>
    %13 = tpu.matmul %11, %12, %cst_14 {dimension_numbers = #tpu.dot_dimension_numbers<[1], [0], [0], [1], [0, 0, 1, 1], [], []>} : vector<128x128xf32>, vector<128x128xf32>, vector<128x128xf32> -> vector<128x128xf32>
    %c0_15 = arith.constant 0 : index
    %c0_16 = arith.constant 0 : index
    %14 = vector.load %arg7[%c0_15, %c0_16] : memref<1x128xf32, #tpu.memory_space<vmem>>, vector<1x128xf32>
    %15 = vector.broadcast %14 : vector<1x128xf32> to vector<128x128xf32>
    %16 = arith.addf %13, %15 : vector<128x128xf32>
    %cst_17 = arith.constant dense<0.000000e+00> : vector<128x128xf32>
    %17 = tpu.matmul %0, %16, %cst_17 {dimension_numbers = #tpu.dot_dimension_numbers<[1], [0], [0], [1], [0, 0, 1, 1], [], []>} : vector<128x128xf32>, vector<128x128xf32>, vector<128x128xf32> -> vector<128x128xf32>
    %cst_18 = arith.constant dense<0.000000e+00> : vector<128x128xf32>
    %18 = tpu.matmul %1, %17, %cst_18 {dimension_numbers = #tpu.dot_dimension_numbers<[1], [0], [0], [1], [0, 0, 1, 1], [], []>} : vector<128x128xf32>, vector<128x128xf32>, vector<128x128xf32> -> vector<128x128xf32>
    %c0_19 = arith.constant 0 : index
    %c0_20 = arith.constant 0 : index
    %19 = vector.load %arg8[%c0_19, %c0_20] : memref<128x128xf32, #tpu.memory_space<vmem>>, vector<128x128xf32>
    tpu.vector_store %arg8[%c0_19, %c0_20], %18 {strides = array<i32>} : memref<128x128xf32, #tpu.memory_space<vmem>>, vector<128x128xf32>,
    return
  }
  func.func @transform_0(%arg0: i32) -> (i32, i32) {
    %c0_i32 = arith.constant 0 : i32
    %c0_i32_0 = arith.constant 0 : i32
    %c0_i32_1 = arith.constant 0 : i32
    return %c0_i32, %c0_i32_0 : i32, i32
  }
  func.func @transform_1(%arg0: i32) -> (i32, i32) {
    %c0_i32 = arith.constant 0 : i32
    %c0_i32_0 = arith.constant 0 : i32
    %c0_i32_1 = arith.constant 0 : i32
    return %c0_i32, %c0_i32_0 : i32, i32
  }
  func.func @transform_2(%arg0: i32) -> (i32, i32) {
    %c0_i32 = arith.constant 0 : i32
    %c0_i32_0 = arith.constant 0 : i32
    %c0_i32_1 = arith.constant 0 : i32
    return %c0_i32, %c0_i32_0 : i32, i32
  }
  func.func @transform_3(%arg0: i32) -> (i32, i32) {
    %c0_i32 = arith.constant 0 : i32
    %c0_i32_0 = arith.constant 0 : i32
    %c0_i32_1 = arith.constant 0 : i32
    return %c0_i32, %c0_i32_0 : i32, i32
  }
  func.func @transform_4(%arg0: i32) -> (i32, i32) {
    %c0_i32 = arith.constant 0 : i32
    %c0_i32_0 = arith.constant 0 : i32
    %c0_i32_1 = arith.constant 0 : i32
    return %c0_i32, %c0_i32_0 : i32, i32
  }
  func.func @transform_5(%arg0: i32) -> (i32, i32) {
    %c0_i32 = arith.constant 0 : i32
    %c0_i32_0 = arith.constant 0 : i32
    %c0_i32_1 = arith.constant 0 : i32
    return %c0_i32, %c0_i32_0 : i32, i32
  }
  func.func @transform_6(%arg0: i32) -> (i32, i32) {
    %c0_i32 = arith.constant 0 : i32
    %c0_i32_0 = arith.constant 0 : i32
    %c0_i32_1 = arith.constant 0 : i32
    return %c0_i32, %c0_i32_0 : i32, i32
  }
  func.func @transform_7(%arg0: i32) -> (i32, i32) {
    %c0_i32 = arith.constant 0 : i32
    %c0_i32_0 = arith.constant 0 : i32
    %c0_i32_1 = arith.constant 0 : i32
    return %c0_i32, %c0_i32_0 : i32, i32
  }
}

</mosaic_0001>

<llo_original>
// kernel: tpu_custom_call.1
$region0: #{tpu_custom_call.1}
  #allocation0 [shape = 'u32[]', space=smem, size = 0x4, offset = 0x4, fixed_abs, tag = 'smem constant byte address 0x4 - core index']
  #allocation1 [shape = 'u32[144,128]{1,0:T(1,128)}', space=vmem, size = 0x12000, scoped, tag = 'internal scratch']
  %s0 = inlined_call_operand.vmem [shape: f32[128,32], index: 0, kind: input, shape index: {}]
  %s1 = inlined_call_operand.vmem [shape: f32[128,128], index: 1, kind: input, shape index: {}]
  %s2 = inlined_call_operand.hbm [shape: f32[128,128], index: 2, kind: input, shape index: {}]
  %s3 = inlined_call_operand.vmem [shape: f32[32,128], index: 3, kind: input, shape index: {}]
  %s4 = inlined_call_operand.vmem [shape: f32[1,128], index: 4, kind: input, shape index: {}]
  %s5 = inlined_call_operand.hbm [shape: f32[128,128], index: 5, kind: input, shape index: {}]
  %s6 = inlined_call_operand.vmem [shape: f32[1,128], index: 6, kind: input, shape index: {}]
  %s7 = inlined_call_operand.hbm [shape: f32[128,128], index: 7, kind: output, shape index: {}]
  %s8 = sld [smem:[#allocation0]]
  $region46: #{tpu_custom_call.1} parent=0
    _
  %s10 = ssub.s32 1, %s8
  %s11 = scalar_select 0, %s10, %s8
  $region1: #{tpu_custom_call.1} parent=0
    #allocation2 [shape = 'u8[65536]{0}', space=vmem, size = 0x10000, scoped, tag = 'input window, operand 2, single buffered']
    #allocation3 [shape = 's32[1]{0}', space=sflag, size = 0x4, scoped, tag = 'scoped memory for tpu_custom_call.1']
    #allocation4 [shape = 's32[1]{0}', space=sflag, size = 0x4, scoped, tag = 'scoped memory for tpu_custom_call.1']
    #allocation5 [shape = 'u8[65536]{0}', space=vmem, size = 0x10000, scoped, tag = 'input window, operand 5, single buffered']
    #allocation6 [shape = 's32[1]{0}', space=sflag, size = 0x4, scoped, tag = 'scoped memory for tpu_custom_call.1']
    #allocation7 [shape = 'u8[65536]{0}', space=vmem, size = 0x10000, scoped, tag = 'output window, operand 0, single buffered']
    %12 = vsyncpa [#allocation3], 0
    %13 = vsyncpa [#allocation6], 0
    %14 = vsyncpa [#allocation4], 0
    // Predicated region
    $region2: #{tpu_custom_call.1} parent=1 // pred_check
      _
    $region3: #{tpu_custom_call.1} parent=1 // pred_check_branch
      %16 = sbr.rel (0) target = $region5
    $region4: #{tpu_custom_call.1} parent=1 // pred_region
      _
    $region5: #{tpu_custom_call.1} parent=1 // pred_fallthru
      _
    // Predicated region
    $region6: #{tpu_custom_call.1} parent=1 // pred_check
      _
    $region7: #{tpu_custom_call.1} parent=1 // pred_check_branch
      %18 = sbr.rel (0) target = $region9
    $region8: #{tpu_custom_call.1} parent=1 // pred_region
      _
    $region9: #{tpu_custom_call.1} parent=1 // pred_fallthru
      _
    // Predicated region
    $region10: #{tpu_custom_call.1} parent=1 // pred_check
      _
    $region11: #{tpu_custom_call.1} parent=1 // pred_check_branch
      %20 = sbr.rel (0) target = $region13
    $region12: #{tpu_custom_call.1} parent=1 // pred_region
      %s22 = ssub.s32 2048, 2048
      %23 = vsyncadd [#allocation3], %s22
      %s24 = sshll.u32 [#allocation2], 4
      %s25 = int_to_ptr.vmem [resolvable:$true] %s24
      %30 = dma.hbm_to_vmem [thread:$0]  %s2, 2048, %s25, [#allocation3], 128, 128, 8
    $region13: #{tpu_custom_call.1} parent=1 // pred_fallthru
      _
    // Predicated region
    $region14: #{tpu_custom_call.1} parent=1 // pred_check
      _
    $region15: #{tpu_custom_call.1} parent=1 // pred_check_branch
      %32 = sbr.rel (0) target = $region17
    $region16: #{tpu_custom_call.1} parent=1 // pred_region
      _
    $region17: #{tpu_custom_call.1} parent=1 // pred_fallthru
      _
    // Predicated region
    $region18: #{tpu_custom_call.1} parent=1 // pred_check
      _
    $region19: #{tpu_custom_call.1} parent=1 // pred_check_branch
      %34 = sbr.rel (0) target = $region21
    $region20: #{tpu_custom_call.1} parent=1 // pred_region
      _
    $region21: #{tpu_custom_call.1} parent=1 // pred_fallthru
      _
    // Predicated region
    $region22: #{tpu_custom_call.1} parent=1 // pred_check
      _
    $region23: #{tpu_custom_call.1} parent=1 // pred_check_branch
      %36 = sbr.rel (0) target = $region25
    $region24: #{tpu_custom_call.1} parent=1 // pred_region
      %s38 = ssub.s32 2048, 2048
      %39 = vsyncadd [#allocation6], %s38
      %s40 = sshll.u32 [#allocation5], 4
      %s41 = int_to_ptr.vmem [resolvable:$true] %s40
      %46 = dma.hbm_to_vmem [thread:$0]  %s5, 2048, %s41, [#allocation6], 128, 128, 8
    $region25: #{tpu_custom_call.1} parent=1 // pred_fallthru
      _
    // Predicated region
    $region26: #{tpu_custom_call.1} parent=1 // pred_check
      _
    $region27: #{tpu_custom_call.1} parent=1 // pred_check_branch
      %48 = sbr.rel (0) target = $region29
    $region28: #{tpu_custom_call.1} parent=1 // pred_region
      _
    $region29: #{tpu_custom_call.1} parent=1 // pred_fallthru
      _
    // Predicated region
    $region30: #{tpu_custom_call.1} parent=1 // pred_check
      _
    $region31: #{tpu_custom_call.1} parent=1 // pred_check_branch
      %50 = sbr.rel (0) target = $region33
    $region32: #{tpu_custom_call.1} parent=1 // pred_region
      %51 = dma.done [#allocation3], 2048
    $region33: #{tpu_custom_call.1} parent=1 // pred_fallthru
      _
    // Predicated region
    $region34: #{tpu_custom_call.1} parent=1 // pred_check
      _
    $region35: #{tpu_custom_call.1} parent=1 // pred_check_branch
      %53 = sbr.rel (0) target = $region37
    $region36: #{tpu_custom_call.1} parent=1 // pred_region
      %54 = dma.done [#allocation6], 2048
    $region37: #{tpu_custom_call.1} parent=1 // pred_fallthru
      _
    %v55 = vld [vmem:[#allocation2] sm:$0xff]
    %v56 = vld [vmem:[#allocation2 + $0x8] sm:$0xff]
    %v57 = vld [vmem:[#allocation2 + $0x10] sm:$0xff]
    %v58 = vld [vmem:[#allocation2 + $0x18] sm:$0xff]
    %v59 = vld [vmem:[#allocation2 + $0x20] sm:$0xff]
    %v60 = vld [vmem:[#allocation2 + $0x28] sm:$0xff]
    %v61 = vld [vmem:[#allocation2 + $0x30] sm:$0xff]
    %v62 = vld [vmem:[#allocation2 + $0x38] sm:$0xff]
    %v63 = vld [vmem:[#allocation2 + $0x40] sm:$0xff]
    %v64 = vld [vmem:[#allocation2 + $0x48] sm:$0xff]
    %v65 = vld [vmem:[#allocation2 + $0x50] sm:$0xff]
    %v66 = vld [vmem:[#allocation2 + $0x58] sm:$0xff]
    %v67 = vld [vmem:[#allocation2 + $0x60] sm:$0xff]
    %v68 = vld [vmem:[#allocation2 + $0x68] sm:$0xff]
    %v69 = vld [vmem:[#allocation2 + $0x70] sm:$0xff]
    %v70 = vld [vmem:[#allocation2 + $0x78] sm:$0xff]
    %v71 = vld [vmem:[%s1] sm:$0xff]
    %v72 = vld [vmem:[%s1 + $0x8] sm:$0xff]
    %v73 = vld [vmem:[%s1 + $0x10] sm:$0xff]
    %v74 = vld [vmem:[%s1 + $0x18] sm:$0xff]
    %v75 = vld [vmem:[%s1 + $0x20] sm:$0xff]
    %v76 = vld [vmem:[%s1 + $0x28] sm:$0xff]
    %v77 = vld [vmem:[%s1 + $0x30] sm:$0xff]
    %v78 = vld [vmem:[%s1 + $0x38] sm:$0xff]
    %v79 = vld [vmem:[%s1 + $0x40] sm:$0xff]
    %v80 = vld [vmem:[%s1 + $0x48] sm:$0xff]
    %v81 = vld [vmem:[%s1 + $0x50] sm:$0xff]
    %v82 = vld [vmem:[%s1 + $0x58] sm:$0xff]
    %v83 = vld [vmem:[%s1 + $0x60] sm:$0xff]
    %v84 = vld [vmem:[%s1 + $0x68] sm:$0xff]
    %v85 = vld [vmem:[%s1 + $0x70] sm:$0xff]
    %v86 = vld [vmem:[%s1 + $0x78] sm:$0xff]
    %v87 = vld [vmem:[%s0] sm:$0xff]
    %v88 = vld [vmem:[%s0 + $0x8] sm:$0xff]
    %v89 = vld [vmem:[%s0 + $0x10] sm:$0xff]
    %v90 = vld [vmem:[%s0 + $0x18] sm:$0xff]
    %v91 = vld [vmem:[%s0 + $0x20] sm:$0xff]
    %v92 = vld [vmem:[%s0 + $0x28] sm:$0xff]
    %v93 = vld [vmem:[%s0 + $0x30] sm:$0xff]
    %v94 = vld [vmem:[%s0 + $0x38] sm:$0xff]
    %v95 = vld [vmem:[%s0 + $0x40] sm:$0xff]
    %v96 = vld [vmem:[%s0 + $0x48] sm:$0xff]
    %v97 = vld [vmem:[%s0 + $0x50] sm:$0xff]
    %v98 = vld [vmem:[%s0 + $0x58] sm:$0xff]
    %v99 = vld [vmem:[%s0 + $0x60] sm:$0xff]
    %v100 = vld [vmem:[%s0 + $0x68] sm:$0xff]
    %v101 = vld [vmem:[%s0 + $0x70] sm:$0xff]
    %v102 = vld [vmem:[%s0 + $0x78] sm:$0xff]
    %v103 = vld [vmem:[%s3] sm:$0xff]
    %v104 = vld [vmem:[%s3 + $0x8] sm:$0xff]
    %v105 = vld [vmem:[%s3 + $0x10] sm:$0xff]
    %v106 = vld [vmem:[%s3 + $0x18] sm:$0xff]
    %v107 = vld [vmem:[%s4] sm:$0x1]
    %v109 = vlaneseq
    %v110 = vshrl.u32 %v109, 7
    %v111 = vsub.s32 0, %v110
    %v112 = vrot.slane %v107, %v111
    %vm114 = vcmask 261120
    %v116 = vsel %vm114, %v87, 0
    %v119 = vsel %vm114, %v88, 0
    %v122 = vsel %vm114, %v89, 0
    %v125 = vsel %vm114, %v90, 0
    %v128 = vsel %vm114, %v91, 0
    %v131 = vsel %vm114, %v92, 0
    %v134 = vsel %vm114, %v93, 0
    %v137 = vsel %vm114, %v94, 0
    %v140 = vsel %vm114, %v95, 0
    %v143 = vsel %vm114, %v96, 0
    %v146 = vsel %vm114, %v97, 0
    %v149 = vsel %vm114, %v98, 0
    %v152 = vsel %vm114, %v99, 0
    %v155 = vsel %vm114, %v100, 0
    %v158 = vsel %vm114, %v101, 0
    %v161 = vsel %vm114, %v102, 0
    %163 = vmatprep.subr.mxu0 0.0
    %164 = vmatpush1.msra.mxu0 0.0
    %165 = vmatprep.subr.mxu0 0.0
    %166 = vmatpush1.msra.mxu0 0.0
    %167 = vmatprep.subr.mxu0 0.0
    %168 = vmatpush1.msra.mxu0 0.0
    %169 = vmatprep.subr.mxu0 0.0
    %170 = vmatpush1.msra.mxu0 0.0
    %171 = vmatprep.subr.mxu0 0.0
    %172 = vmatpush1.msra.mxu0 0.0
    %173 = vmatprep.subr.mxu0 0.0
    %174 = vmatpush1.msra.mxu0 0.0
    %175 = vmatprep.subr.mxu0 0.0
    %176 = vmatpush1.msra.mxu0 0.0
    %177 = vmatprep.subr.mxu0 0.0
    %178 = vmatpush1.msra.mxu0 0.0
    %179 = vmatprep.subr.mxu0 0.0
    %180 = vmatpush1.msra.mxu0 0.0
    %181 = vmatprep.subr.mxu0 0.0
    %182 = vmatpush1.msra.mxu0 0.0
    %183 = vmatprep.subr.mxu0 0.0
    %184 = vmatpush1.msra.mxu0 0.0
    %185 = vmatprep.subr.mxu0 0.0
    %186 = vmatpush1.msra.mxu0 0.0
    %187 = vmatprep.subr.mxu0 0.0
    %188 = vmatpush1.msra.mxu0 %v106
    %189 = vmatprep.subr.mxu0 0.0
    %190 = vmatpush1.msra.mxu0 %v105
    %191 = vmatprep.subr.mxu0 0.0
    %192 = vmatpush1.msra.mxu0 %v104
    %193 = vmatprep.subr.mxu0 0.0
    %194 = vmatpush1.msra.mxu0 %v103
    %195 = vmatprep.subr.mxu0 0.0
    %196 = vmatpush2.msra.mxu0 0.0
    %197 = vmatprep.subr.mxu0 0.0
    %198 = vmatpush2.msra.mxu0 0.0
    %199 = vmatprep.subr.mxu0 0.0
    %200 = vmatpush2.msra.mxu0 0.0
    %201 = vmatprep.subr.mxu0 0.0
    %202 = vmatpush2.msra.mxu0 0.0
    %203 = vmatprep.subr.mxu0 0.0
    %204 = vmatpush2.msra.mxu0 0.0
    %205 = vmatprep.subr.mxu0 0.0
    %206 = vmatpush2.msra.mxu0 0.0
    %207 = vmatprep.subr.mxu0 0.0
    %208 = vmatpush2.msra.mxu0 0.0
    %209 = vmatprep.subr.mxu0 0.0
    %210 = vmatpush2.msra.mxu0 0.0
    %211 = vmatprep.subr.mxu0 0.0
    %212 = vmatpush2.msra.mxu0 0.0
    %213 = vmatprep.subr.mxu0 0.0
    %214 = vmatpush2.msra.mxu0 0.0
    %215 = vmatprep.subr.mxu0 0.0
    %216 = vmatpush2.msra.mxu0 0.0
    %217 = vmatprep.subr.mxu0 0.0
    %218 = vmatpush2.msra.mxu0 0.0
    %219 = vmatprep.subr.mxu0 0.0
    %220 = vmatpush2.msra.mxu0 0.0
    %221 = vmatprep.subr.mxu0 0.0
    %222 = vmatpush2.msra.mxu0 0.0
    %223 = vmatprep.subr.mxu0 0.0
    %224 = vmatpush2.msra.mxu0 0.0
    %225 = vmatprep.subr.mxu0 0.0
    %226 = vmatpush2.msra.mxu0 0.0
    %227 = vmatprep.mubr.f32.mxu0 0.0
    %228 = vmatmul.mubr.f32.gmra.mxu0 %v116
    %v229 = vpop.f32.mrf.mxu0
    %v230 = vadd.f32 %v112, %v229
    %v231 = vpop.f32.mrf.mxu0
    %232 = vmatprep.mubr.f32.mxu0 0.0
    %233 = vmatmul.mubr.f32.gmra.mxu0 %v119
    %v234 = vpop.f32.mrf.mxu0
    %v235 = vadd.f32 %v112, %v234
    %v236 = vpop.f32.mrf.mxu0
    %237 = vmatprep.mubr.f32.mxu0 0.0
    %238 = vmatmul.mubr.f32.gmra.mxu0 %v122
    %v239 = vpop.f32.mrf.mxu0
    %v240 = vadd.f32 %v112, %v239
    %v241 = vpop.f32.mrf.mxu0
    %242 = vmatprep.mubr.f32.mxu0 0.0
    %243 = vmatmul.mubr.f32.gmra.mxu0 %v125
    %v244 = vpop.f32.mrf.mxu0
    %v245 = vadd.f32 %v112, %v244
    %v246 = vpop.f32.mrf.mxu0
    %247 = vmatprep.mubr.f32.mxu0 0.0
    %248 = vmatmul.mubr.f32.gmra.mxu0 %v128
    %v249 = vpop.f32.mrf.mxu0
    %v250 = vadd.f32 %v112, %v249
    %v251 = vpop.f32.mrf.mxu0
    %252 = vmatprep.mubr.f32.mxu0 0.0
    %253 = vmatmul.mubr.f32.gmra.mxu0 %v131
    %v254 = vpop.f32.mrf.mxu0
    %v255 = vadd.f32 %v112, %v254
    %v256 = vpop.f32.mrf.mxu0
    %257 = vmatprep.mubr.f32.mxu0 0.0
    %258 = vmatmul.mubr.f32.gmra.mxu0 %v134
    %v259 = vpop.f32.mrf.mxu0
    %v260 = vadd.f32 %v112, %v259
    %v261 = vpop.f32.mrf.mxu0
    %262 = vmatprep.mubr.f32.mxu0 0.0
    %263 = vmatmul.mubr.f32.gmra.mxu0 %v137
    %v264 = vpop.f32.mrf.mxu0
    %v265 = vadd.f32 %v112, %v264
    %v266 = vpop.f32.mrf.mxu0
    %267 = vmatprep.mubr.f32.mxu0 0.0
    %268 = vmatmul.mubr.f32.gmra.mxu0 %v140
    %v269 = vpop.f32.mrf.mxu0
    %v270 = vadd.f32 %v112, %v269
    %v271 = vpop.f32.mrf.mxu0
    %272 = vmatprep.mubr.f32.mxu0 0.0
    %273 = vmatmul.mubr.f32.gmra.mxu0 %v143
    %v274 = vpop.f32.mrf.mxu0
    %v275 = vadd.f32 %v112, %v274
    %v276 = vpop.f32.mrf.mxu0
    %277 = vmatprep.mubr.f32.mxu0 0.0
    %278 = vmatmul.mubr.f32.gmra.mxu0 %v146
    %v279 = vpop.f32.mrf.mxu0
    %v280 = vadd.f32 %v112, %v279
    %v281 = vpop.f32.mrf.mxu0
    %282 = vmatprep.mubr.f32.mxu0 0.0
    %283 = vmatmul.mubr.f32.gmra.mxu0 %v149
    %v284 = vpop.f32.mrf.mxu0
    %v285 = vadd.f32 %v112, %v284
    %v286 = vpop.f32.mrf.mxu0
    %287 = vmatprep.mubr.f32.mxu0 0.0
    %288 = vmatmul.mubr.f32.gmra.mxu0 %v152
    %v289 = vpop.f32.mrf.mxu0
    %v290 = vadd.f32 %v112, %v289
    %v291 = vpop.f32.mrf.mxu0
    %292 = vmatprep.mubr.f32.mxu0 0.0
    %293 = vmatmul.mubr.f32.gmra.mxu0 %v155
    %v294 = vpop.f32.mrf.mxu0
    %v295 = vadd.f32 %v112, %v294
    %v296 = vpop.f32.mrf.mxu0
    %297 = vmatprep.mubr.f32.mxu0 0.0
    %298 = vmatmul.mubr.f32.gmra.mxu0 %v158
    %v299 = vpop.f32.mrf.mxu0
    %v300 = vadd.f32 %v112, %v299
    %v301 = vpop.f32.mrf.mxu0
    %302 = vmatprep.mubr.f32.mxu0 0.0
    %303 = vmatmul.mubr.f32.gmra.mxu0 %v161
    %v304 = vpop.f32.mrf.mxu0
    %v305 = vadd.f32 %v112, %v304
    %v306 = vpop.f32.mrf.mxu0
    %307 = vdwg.mxu0
    %308 = vmatprep.subr.mxu0 0.0
    %309 = vmatpush1.msra.mxu0 %v305
    %310 = vmatprep.subr.mxu0 0.0
    %311 = vmatpush1.msra.mxu0 %v300
    %312 = vmatprep.subr.mxu0 0.0
    %313 = vmatpush1.msra.mxu0 %v295
    %314 = vmatprep.subr.mxu0 0.0
    %315 = vmatpush1.msra.mxu0 %v290
    %316 = vmatprep.subr.mxu0 0.0
    %317 = vmatpush1.msra.mxu0 %v285
    %318 = vmatprep.subr.mxu0 0.0
    %319 = vmatpush1.msra.mxu0 %v280
    %320 = vmatprep.subr.mxu0 0.0
    %321 = vmatpush1.msra.mxu0 %v275
    %322 = vmatprep.subr.mxu0 0.0
    %323 = vmatpush1.msra.mxu0 %v270
    %324 = vmatprep.subr.mxu0 0.0
    %325 = vmatpush1.msra.mxu0 %v265
    %326 = vmatprep.subr.mxu0 0.0
    %327 = vmatpush1.msra.mxu0 %v260
    %328 = vmatprep.subr.mxu0 0.0
    %329 = vmatpush1.msra.mxu0 %v255
    %330 = vmatprep.subr.mxu0 0.0
    %331 = vmatpush1.msra.mxu0 %v250
    %332 = vmatprep.subr.mxu0 0.0
    %333 = vmatpush1.msra.mxu0 %v245
    %334 = vmatprep.subr.mxu0 0.0
    %335 = vmatpush1.msra.mxu0 %v240
    %336 = vmatprep.subr.mxu0 0.0
    %337 = vmatpush1.msra.mxu0 %v235
    %338 = vmatprep.subr.mxu0 0.0
    %339 = vmatpush1.msra.mxu0 %v230
    %340 = vmatprep.subr.mxu0 0.0
    %341 = vmatpush2.msra.mxu0 0.0
    %342 = vmatprep.subr.mxu0 0.0
    %343 = vmatpush2.msra.mxu0 0.0
    %344 = vmatprep.subr.mxu0 0.0
    %345 = vmatpush2.msra.mxu0 0.0
    %346 = vmatprep.subr.mxu0 0.0
    %347 = vmatpush2.msra.mxu0 0.0
    %348 = vmatprep.subr.mxu0 0.0
    %349 = vmatpush2.msra.mxu0 0.0
    %350 = vmatprep.subr.mxu0 0.0
    %351 = vmatpush2.msra.mxu0 0.0
    %352 = vmatprep.subr.mxu0 0.0
    %353 = vmatpush2.msra.mxu0 0.0
    %354 = vmatprep.subr.mxu0 0.0
    %355 = vmatpush2.msra.mxu0 0.0
    %356 = vmatprep.subr.mxu0 0.0
    %357 = vmatpush2.msra.mxu0 0.0
    %358 = vmatprep.subr.mxu0 0.0
    %359 = vmatpush2.msra.mxu0 0.0
    %360 = vmatprep.subr.mxu0 0.0
    %361 = vmatpush2.msra.mxu0 0.0
    %362 = vmatprep.subr.mxu0 0.0
    %363 = vmatpush2.msra.mxu0 0.0
    %364 = vmatprep.subr.mxu0 0.0
    %365 = vmatpush2.msra.mxu0 0.0
    %366 = vmatprep.subr.mxu0 0.0
    %367 = vmatpush2.msra.mxu0 0.0
    %368 = vmatprep.subr.mxu0 0.0
    %369 = vmatpush2.msra.mxu0 0.0
    %370 = vmatprep.subr.mxu0 0.0
    %371 = vmatpush2.msra.mxu0 0.0
    %372 = vmatprep.mubr.f32.mxu0 0.0
    %373 = vmatmul.mubr.f32.gmra.mxu0 %v55
    %v374 = vpop.f32.mrf.mxu0
    %v375 = vadd.f32 0.0, %v374
    %v376 = vpop.f32.mrf.mxu0
    %377 = vmatprep.mubr.f32.mxu0 0.0
    %378 = vmatmul.mubr.f32.gmra.mxu0 %v56
    %v379 = vpop.f32.mrf.mxu0
    %v380 = vadd.f32 0.0, %v379
    %v381 = vpop.f32.mrf.mxu0
    %382 = vmatprep.mubr.f32.mxu0 0.0
    %383 = vmatmul.mubr.f32.gmra.mxu0 %v57
    %v384 = vpop.f32.mrf.mxu0
    %v385 = vadd.f32 0.0, %v384
    %v386 = vpop.f32.mrf.mxu0
    %387 = vmatprep.mubr.f32.mxu0 0.0
    %388 = vmatmul.mubr.f32.gmra.mxu0 %v58
    %v389 = vpop.f32.mrf.mxu0
    %v390 = vadd.f32 0.0, %v389
    %v391 = vpop.f32.mrf.mxu0
    %392 = vmatprep.mubr.f32.mxu0 0.0
    %393 = vmatmul.mubr.f32.gmra.mxu0 %v59
    %v394 = vpop.f32.mrf.mxu0
    %v395 = vadd.f32 0.0, %v394
    %v396 = vpop.f32.mrf.mxu0
    %397 = vmatprep.mubr.f32.mxu0 0.0
    %398 = vmatmul.mubr.f32.gmra.mxu0 %v60
    %v399 = vpop.f32.mrf.mxu0
    %v400 = vadd.f32 0.0, %v399
    %v401 = vpop.f32.mrf.mxu0
    %402 = vmatprep.mubr.f32.mxu0 0.0
    %403 = vmatmul.mubr.f32.gmra.mxu0 %v61
    %v404 = vpop.f32.mrf.mxu0
    %v405 = vadd.f32 0.0, %v404
    %v406 = vpop.f32.mrf.mxu0
    %407 = vmatprep.mubr.f32.mxu0 0.0
    %408 = vmatmul.mubr.f32.gmra.mxu0 %v62
    %v409 = vpop.f32.mrf.mxu0
    %v410 = vadd.f32 0.0, %v409
    %v411 = vpop.f32.mrf.mxu0
    %412 = vmatprep.mubr.f32.mxu0 0.0
    %413 = vmatmul.mubr.f32.gmra.mxu0 %v63
    %v414 = vpop.f32.mrf.mxu0
    %v415 = vadd.f32 0.0, %v414
    %v416 = vpop.f32.mrf.mxu0
    %417 = vmatprep.mubr.f32.mxu0 0.0
    %418 = vmatmul.mubr.f32.gmra.mxu0 %v64
    %v419 = vpop.f32.mrf.mxu0
    %v420 = vadd.f32 0.0, %v419
    %v421 = vpop.f32.mrf.mxu0
    %422 = vmatprep.mubr.f32.mxu0 0.0
    %423 = vmatmul.mubr.f32.gmra.mxu0 %v65
    %v424 = vpop.f32.mrf.mxu0
    %v425 = vadd.f32 0.0, %v424
    %v426 = vpop.f32.mrf.mxu0
    %427 = vmatprep.mubr.f32.mxu0 0.0
    %428 = vmatmul.mubr.f32.gmra.mxu0 %v66
    %v429 = vpop.f32.mrf.mxu0
    %v430 = vadd.f32 0.0, %v429
    %v431 = vpop.f32.mrf.mxu0
    %432 = vmatprep.mubr.f32.mxu0 0.0
    %433 = vmatmul.mubr.f32.gmra.mxu0 %v67
    %v434 = vpop.f32.mrf.mxu0
    %v435 = vadd.f32 0.0, %v434
    %v436 = vpop.f32.mrf.mxu0
    %437 = vmatprep.mubr.f32.mxu0 0.0
    %438 = vmatmul.mubr.f32.gmra.mxu0 %v68
    %v439 = vpop.f32.mrf.mxu0
    %v440 = vadd.f32 0.0, %v439
    %v441 = vpop.f32.mrf.mxu0
    %442 = vmatprep.mubr.f32.mxu0 0.0
    %443 = vmatmul.mubr.f32.gmra.mxu0 %v69
    %v444 = vpop.f32.mrf.mxu0
    %v445 = vadd.f32 0.0, %v444
    %v446 = vpop.f32.mrf.mxu0
    %447 = vmatprep.mubr.f32.mxu0 0.0
    %448 = vmatmul.mubr.f32.gmra.mxu0 %v70
    %v449 = vpop.f32.mrf.mxu0
    %v450 = vadd.f32 0.0, %v449
    %v451 = vpop.f32.mrf.mxu0
    %452 = vdwg.mxu0
    %453 = vmatprep.subr.mxu0 0.0
    %454 = vmatpush1.msra.mxu0 %v450
    %455 = vmatprep.subr.mxu0 0.0
    %456 = vmatpush1.msra.mxu0 %v445
    %457 = vmatprep.subr.mxu0 0.0
    %458 = vmatpush1.msra.mxu0 %v440
    %459 = vmatprep.subr.mxu0 0.0
    %460 = vmatpush1.msra.mxu0 %v435
    %461 = vmatprep.subr.mxu0 0.0
    %462 = vmatpush1.msra.mxu0 %v430
    %463 = vmatprep.subr.mxu0 0.0
    %464 = vmatpush1.msra.mxu0 %v425
    %465 = vmatprep.subr.mxu0 0.0
    %466 = vmatpush1.msra.mxu0 %v420
    %467 = vmatprep.subr.mxu0 0.0
    %468 = vmatpush1.msra.mxu0 %v415
    %469 = vmatprep.subr.mxu0 0.0
    %470 = vmatpush1.msra.mxu0 %v410
    %471 = vmatprep.subr.mxu0 0.0
    %472 = vmatpush1.msra.mxu0 %v405
    %473 = vmatprep.subr.mxu0 0.0
    %474 = vmatpush1.msra.mxu0 %v400
    %475 = vmatprep.subr.mxu0 0.0
    %476 = vmatpush1.msra.mxu0 %v395
    %477 = vmatprep.subr.mxu0 0.0
    %478 = vmatpush1.msra.mxu0 %v390
    %479 = vmatprep.subr.mxu0 0.0
    %480 = vmatpush1.msra.mxu0 %v385
    %481 = vmatprep.subr.mxu0 0.0
    %482 = vmatpush1.msra.mxu0 %v380
    %483 = vmatprep.subr.mxu0 0.0
    %484 = vmatpush1.msra.mxu0 %v375
    %485 = vmatprep.subr.mxu0 0.0
    %486 = vmatpush2.msra.mxu0 0.0
    %487 = vmatprep.subr.mxu0 0.0
    %488 = vmatpush2.msra.mxu0 0.0
    %489 = vmatprep.subr.mxu0 0.0
    %490 = vmatpush2.msra.mxu0 0.0
    %491 = vmatprep.subr.mxu0 0.0
    %492 = vmatpush2.msra.mxu0 0.0
    %493 = vmatprep.subr.mxu0 0.0
    %494 = vmatpush2.msra.mxu0 0.0
    %495 = vmatprep.subr.mxu0 0.0
    %496 = vmatpush2.msra.mxu0 0.0
    %497 = vmatprep.subr.mxu0 0.0
    %498 = vmatpush2.msra.mxu0 0.0
    %499 = vmatprep.subr.mxu0 0.0
    %500 = vmatpush2.msra.mxu0 0.0
    %501 = vmatprep.subr.mxu0 0.0
    %502 = vmatpush2.msra.mxu0 0.0
    %503 = vmatprep.subr.mxu0 0.0
    %504 = vmatpush2.msra.mxu0 0.0
    %505 = vmatprep.subr.mxu0 0.0
    %506 = vmatpush2.msra.mxu0 0.0
    %507 = vmatprep.subr.mxu0 0.0
    %508 = vmatpush2.msra.mxu0 0.0
    %509 = vmatprep.subr.mxu0 0.0
    %510 = vmatpush2.msra.mxu0 0.0
    %511 = vmatprep.subr.mxu0 0.0
    %512 = vmatpush2.msra.mxu0 0.0
    %513 = vmatprep.subr.mxu0 0.0
    %514 = vmatpush2.msra.mxu0 0.0
    %515 = vmatprep.subr.mxu0 0.0
    %516 = vmatpush2.msra.mxu0 0.0
    %517 = vmatprep.mubr.f32.mxu0 0.0
    %518 = vmatmul.mubr.f32.gmra.mxu0 %v71
    %v519 = vpop.f32.mrf.mxu0
    %v520 = vadd.f32 0.0, %v519
    %v521 = vpop.f32.mrf.mxu0
    %522 = vmatprep.mubr.f32.mxu0 0.0
    %523 = vmatmul.mubr.f32.gmra.mxu0 %v72
    %v524 = vpop.f32.mrf.mxu0
    %v525 = vadd.f32 0.0, %v524
    %v526 = vpop.f32.mrf.mxu0
    %527 = vmatprep.mubr.f32.mxu0 0.0
    %528 = vmatmul.mubr.f32.gmra.mxu0 %v73
    %v529 = vpop.f32.mrf.mxu0
    %v530 = vadd.f32 0.0, %v529
    %v531 = vpop.f32.mrf.mxu0
    %532 = vmatprep.mubr.f32.mxu0 0.0
    %533 = vmatmul.mubr.f32.gmra.mxu0 %v74
    %v534 = vpop.f32.mrf.mxu0
    %v535 = vadd.f32 0.0, %v534
    %v536 = vpop.f32.mrf.mxu0
    %537 = vmatprep.mubr.f32.mxu0 0.0
    %538 = vmatmul.mubr.f32.gmra.mxu0 %v75
    %v539 = vpop.f32.mrf.mxu0
    %v540 = vadd.f32 0.0, %v539
    %v541 = vpop.f32.mrf.mxu0
    %542 = vmatprep.mubr.f32.mxu0 0.0
    %543 = vmatmul.mubr.f32.gmra.mxu0 %v76
    %v544 = vpop.f32.mrf.mxu0
    %v545 = vadd.f32 0.0, %v544
    %v546 = vpop.f32.mrf.mxu0
    %547 = vmatprep.mubr.f32.mxu0 0.0
    %548 = vmatmul.mubr.f32.gmra.mxu0 %v77
    %v549 = vpop.f32.mrf.mxu0
    %v550 = vadd.f32 0.0, %v549
    %v551 = vpop.f32.mrf.mxu0
    %552 = vmatprep.mubr.f32.mxu0 0.0
    %553 = vmatmul.mubr.f32.gmra.mxu0 %v78
    %v554 = vpop.f32.mrf.mxu0
    %v555 = vadd.f32 0.0, %v554
    %v556 = vpop.f32.mrf.mxu0
    %557 = vmatprep.mubr.f32.mxu0 0.0
    %558 = vmatmul.mubr.f32.gmra.mxu0 %v79
    %v559 = vpop.f32.mrf.mxu0
    %v560 = vadd.f32 0.0, %v559
    %v561 = vpop.f32.mrf.mxu0
    %562 = vmatprep.mubr.f32.mxu0 0.0
    %563 = vmatmul.mubr.f32.gmra.mxu0 %v80
    %v564 = vpop.f32.mrf.mxu0
    %v565 = vadd.f32 0.0, %v564
    %v566 = vpop.f32.mrf.mxu0
    %567 = vmatprep.mubr.f32.mxu0 0.0
    %568 = vmatmul.mubr.f32.gmra.mxu0 %v81
    %v569 = vpop.f32.mrf.mxu0
    %v570 = vadd.f32 0.0, %v569
    %v571 = vpop.f32.mrf.mxu0
    %572 = vmatprep.mubr.f32.mxu0 0.0
    %573 = vmatmul.mubr.f32.gmra.mxu0 %v82
    %v574 = vpop.f32.mrf.mxu0
    %v575 = vadd.f32 0.0, %v574
    %v576 = vpop.f32.mrf.mxu0
    %577 = vmatprep.mubr.f32.mxu0 0.0
    %578 = vmatmul.mubr.f32.gmra.mxu0 %v83
    %v579 = vpop.f32.mrf.mxu0
    %v580 = vadd.f32 0.0, %v579
    %v581 = vpop.f32.mrf.mxu0
    %582 = vmatprep.mubr.f32.mxu0 0.0
    %583 = vmatmul.mubr.f32.gmra.mxu0 %v84
    %v584 = vpop.f32.mrf.mxu0
    %v585 = vadd.f32 0.0, %v584
    %v586 = vpop.f32.mrf.mxu0
    %587 = vmatprep.mubr.f32.mxu0 0.0
    %588 = vmatmul.mubr.f32.gmra.mxu0 %v85
    %v589 = vpop.f32.mrf.mxu0
    %v590 = vadd.f32 0.0, %v589
    %v591 = vpop.f32.mrf.mxu0
    %592 = vmatprep.mubr.f32.mxu0 0.0
    %593 = vmatmul.mubr.f32.gmra.mxu0 %v86
    %v594 = vpop.f32.mrf.mxu0
    %v595 = vadd.f32 0.0, %v594
    %v596 = vpop.f32.mrf.mxu0
    %597 = vdwg.mxu0
    %v598 = vmax.f32 %v520, 0.0
    %v599 = vmax.f32 %v525, 0.0
    %v600 = vmax.f32 %v530, 0.0
    %v601 = vmax.f32 %v535, 0.0
    %v602 = vmax.f32 %v540, 0.0
    %v603 = vmax.f32 %v545, 0.0
    %v604 = vmax.f32 %v550, 0.0
    %v605 = vmax.f32 %v555, 0.0
    %v606 = vmax.f32 %v560, 0.0
    %v607 = vmax.f32 %v565, 0.0
    %v608 = vmax.f32 %v570, 0.0
    %v609 = vmax.f32 %v575, 0.0
    %v610 = vmax.f32 %v580, 0.0
    %v611 = vmax.f32 %v585, 0.0
    %v612 = vmax.f32 %v590, 0.0
    %v613 = vmax.f32 %v595, 0.0
    %v614 = vld [vmem:[#allocation5] sm:$0xff]
    %v615 = vld [vmem:[#allocation5 + $0x8] sm:$0xff]
    %v616 = vld [vmem:[#allocation5 + $0x10] sm:$0xff]
    %v617 = vld [vmem:[#allocation5 + $0x18] sm:$0xff]
    %v618 = vld [vmem:[#allocation5 + $0x20] sm:$0xff]
    %v619 = vld [vmem:[#allocation5 + $0x28] sm:$0xff]
    %v620 = vld [vmem:[#allocation5 + $0x30] sm:$0xff]
    %v621 = vld [vmem:[#allocation5 + $0x38] sm:$0xff]
    %v622 = vld [vmem:[#allocation5 + $0x40] sm:$0xff]
    %v623 = vld [vmem:[#allocation5 + $0x48] sm:$0xff]
    %v624 = vld [vmem:[#allocation5 + $0x50] sm:$0xff]
    %v625 = vld [vmem:[#allocation5 + $0x58] sm:$0xff]
    %v626 = vld [vmem:[#allocation5 + $0x60] sm:$0xff]
    %v627 = vld [vmem:[#allocation5 + $0x68] sm:$0xff]
    %v628 = vld [vmem:[#allocation5 + $0x70] sm:$0xff]
    %v629 = vld [vmem:[#allocation5 + $0x78] sm:$0xff]
    %v630 = vld [vmem:[%s6] sm:$0x1]
    %v632 = vlaneseq
    %v633 = vshrl.u32 %v632, 7
    %v634 = vsub.s32 0, %v633
    %v635 = vrot.slane %v630, %v634
    %637 = vmatprep.subr.mxu0 0.0
    %638 = vmatpush1.msra.mxu0 %v629
    %639 = vmatprep.subr.mxu0 0.0
    %640 = vmatpush1.msra.mxu0 %v628
    %641 = vmatprep.subr.mxu0 0.0
    %642 = vmatpush1.msra.mxu0 %v627
    %643 = vmatprep.subr.mxu0 0.0
    %644 = vmatpush1.msra.mxu0 %v626
    %645 = vmatprep.subr.mxu0 0.0
    %646 = vmatpush1.msra.mxu0 %v625
    %647 = vmatprep.subr.mxu0 0.0
    %648 = vmatpush1.msra.mxu0 %v624
    %649 = vmatprep.subr.mxu0 0.0
    %650 = vmatpush1.msra.mxu0 %v623
    %651 = vmatprep.subr.mxu0 0.0
    %652 = vmatpush1.msra.mxu0 %v622
    %653 = vmatprep.subr.mxu0 0.0
    %654 = vmatpush1.msra.mxu0 %v621
    %655 = vmatprep.subr.mxu0 0.0
    %656 = vmatpush1.msra.mxu0 %v620
    %657 = vmatprep.subr.mxu0 0.0
    %658 = vmatpush1.msra.mxu0 %v619
    %659 = vmatprep.subr.mxu0 0.0
    %660 = vmatpush1.msra.mxu0 %v618
    %661 = vmatprep.subr.mxu0 0.0
    %662 = vmatpush1.msra.mxu0 %v617
    %663 = vmatprep.subr.mxu0 0.0
    %664 = vmatpush1.msra.mxu0 %v616
    %665 = vmatprep.subr.mxu0 0.0
    %666 = vmatpush1.msra.mxu0 %v615
    %667 = vmatprep.subr.mxu0 0.0
    %668 = vmatpush1.msra.mxu0 %v614
    %669 = vmatprep.subr.mxu0 0.0
    %670 = vmatpush2.msra.mxu0 0.0
    %671 = vmatprep.subr.mxu0 0.0
    %672 = vmatpush2.msra.mxu0 0.0
    %673 = vmatprep.subr.mxu0 0.0
    %674 = vmatpush2.msra.mxu0 0.0
    %675 = vmatprep.subr.mxu0 0.0
    %676 = vmatpush2.msra.mxu0 0.0
    %677 = vmatprep.subr.mxu0 0.0
    %678 = vmatpush2.msra.mxu0 0.0
    %679 = vmatprep.subr.mxu0 0.0
    %680 = vmatpush2.msra.mxu0 0.0
    %681 = vmatprep.subr.mxu0 0.0
    %682 = vmatpush2.msra.mxu0 0.0
    %683 = vmatprep.subr.mxu0 0.0
    %684 = vmatpush2.msra.mxu0 0.0
    %685 = vmatprep.subr.mxu0 0.0
    %686 = vmatpush2.msra.mxu0 0.0
    %687 = vmatprep.subr.mxu0 0.0
    %688 = vmatpush2.msra.mxu0 0.0
    %689 = vmatprep.subr.mxu0 0.0
    %690 = vmatpush2.msra.mxu0 0.0
    %691 = vmatprep.subr.mxu0 0.0
    %692 = vmatpush2.msra.mxu0 0.0
    %693 = vmatprep.subr.mxu0 0.0
    %694 = vmatpush2.msra.mxu0 0.0
    %695 = vmatprep.subr.mxu0 0.0
    %696 = vmatpush2.msra.mxu0 0.0
    %697 = vmatprep.subr.mxu0 0.0
    %698 = vmatpush2.msra.mxu0 0.0
    %699 = vmatprep.subr.mxu0 0.0
    %700 = vmatpush2.msra.mxu0 0.0
    %701 = vmatprep.mubr.f32.mxu0 0.0
    %702 = vmatmul.mubr.f32.gmra.mxu0 %v598
    %v703 = vpop.f32.mrf.mxu0
    %v704 = vadd.f32 %v635, %v703
    %v705 = vpop.f32.mrf.mxu0
    %706 = vmatprep.mubr.f32.mxu0 0.0
    %707 = vmatmul.mubr.f32.gmra.mxu0 %v599
    %v708 = vpop.f32.mrf.mxu0
    %v709 = vadd.f32 %v635, %v708
    %v710 = vpop.f32.mrf.mxu0
    %711 = vmatprep.mubr.f32.mxu0 0.0
    %712 = vmatmul.mubr.f32.gmra.mxu0 %v600
    %v713 = vpop.f32.mrf.mxu0
    %v714 = vadd.f32 %v635, %v713
    %v715 = vpop.f32.mrf.mxu0
    %716 = vmatprep.mubr.f32.mxu0 0.0
    %717 = vmatmul.mubr.f32.gmra.mxu0 %v601
    %v718 = vpop.f32.mrf.mxu0
    %v719 = vadd.f32 %v635, %v718
    %v720 = vpop.f32.mrf.mxu0
    %721 = vmatprep.mubr.f32.mxu0 0.0
    %722 = vmatmul.mubr.f32.gmra.mxu0 %v602
    %v723 = vpop.f32.mrf.mxu0
    %v724 = vadd.f32 %v635, %v723
    %v725 = vpop.f32.mrf.mxu0
    %726 = vmatprep.mubr.f32.mxu0 0.0
    %727 = vmatmul.mubr.f32.gmra.mxu0 %v603
    %v728 = vpop.f32.mrf.mxu0
    %v729 = vadd.f32 %v635, %v728
    %v730 = vpop.f32.mrf.mxu0
    %731 = vmatprep.mubr.f32.mxu0 0.0
    %732 = vmatmul.mubr.f32.gmra.mxu0 %v604
    %v733 = vpop.f32.mrf.mxu0
    %v734 = vadd.f32 %v635, %v733
    %v735 = vpop.f32.mrf.mxu0
    %736 = vmatprep.mubr.f32.mxu0 0.0
    %737 = vmatmul.mubr.f32.gmra.mxu0 %v605
    %v738 = vpop.f32.mrf.mxu0
    %v739 = vadd.f32 %v635, %v738
    %v740 = vpop.f32.mrf.mxu0
    %741 = vmatprep.mubr.f32.mxu0 0.0
    %742 = vmatmul.mubr.f32.gmra.mxu0 %v606
    %v743 = vpop.f32.mrf.mxu0
    %v744 = vadd.f32 %v635, %v743
    %v745 = vpop.f32.mrf.mxu0
    %746 = vmatprep.mubr.f32.mxu0 0.0
    %747 = vmatmul.mubr.f32.gmra.mxu0 %v607
    %v748 = vpop.f32.mrf.mxu0
    %v749 = vadd.f32 %v635, %v748
    %v750 = vpop.f32.mrf.mxu0
    %751 = vmatprep.mubr.f32.mxu0 0.0
    %752 = vmatmul.mubr.f32.gmra.mxu0 %v608
    %v753 = vpop.f32.mrf.mxu0
    %v754 = vadd.f32 %v635, %v753
    %v755 = vpop.f32.mrf.mxu0
    %756 = vmatprep.mubr.f32.mxu0 0.0
    %757 = vmatmul.mubr.f32.gmra.mxu0 %v609
    %v758 = vpop.f32.mrf.mxu0
    %v759 = vadd.f32 %v635, %v758
    %v760 = vpop.f32.mrf.mxu0
    %761 = vmatprep.mubr.f32.mxu0 0.0
    %762 = vmatmul.mubr.f32.gmra.mxu0 %v610
    %v763 = vpop.f32.mrf.mxu0
    %v764 = vadd.f32 %v635, %v763
    %v765 = vpop.f32.mrf.mxu0
    %766 = vmatprep.mubr.f32.mxu0 0.0
    %767 = vmatmul.mubr.f32.gmra.mxu0 %v611
    %v768 = vpop.f32.mrf.mxu0
    %v769 = vadd.f32 %v635, %v768
    %v770 = vpop.f32.mrf.mxu0
    %771 = vmatprep.mubr.f32.mxu0 0.0
    %772 = vmatmul.mubr.f32.gmra.mxu0 %v612
    %v773 = vpop.f32.mrf.mxu0
    %v774 = vadd.f32 %v635, %v773
    %v775 = vpop.f32.mrf.mxu0
    %776 = vmatprep.mubr.f32.mxu0 0.0
    %777 = vmatmul.mubr.f32.gmra.mxu0 %v613
    %v778 = vpop.f32.mrf.mxu0
    %v779 = vadd.f32 %v635, %v778
    %v780 = vpop.f32.mrf.mxu0
    %781 = vdwg.mxu0
    %782 = vmatprep.subr.mxu0 0.0
    %783 = vmatpush1.msra.mxu0 %v779
    %784 = vmatprep.subr.mxu0 0.0
    %785 = vmatpush1.msra.mxu0 %v774
    %786 = vmatprep.subr.mxu0 0.0
    %787 = vmatpush1.msra.mxu0 %v769
    %788 = vmatprep.subr.mxu0 0.0
    %789 = vmatpush1.msra.mxu0 %v764
    %790 = vmatprep.subr.mxu0 0.0
    %791 = vmatpush1.msra.mxu0 %v759
    %792 = vmatprep.subr.mxu0 0.0
    %793 = vmatpush1.msra.mxu0 %v754
    %794 = vmatprep.subr.mxu0 0.0
    %795 = vmatpush1.msra.mxu0 %v749
    %796 = vmatprep.subr.mxu0 0.0
    %797 = vmatpush1.msra.mxu0 %v744
    %798 = vmatprep.subr.mxu0 0.0
    %799 = vmatpush1.msra.mxu0 %v739
    %800 = vmatprep.subr.mxu0 0.0
    %801 = vmatpush1.msra.mxu0 %v734
    %802 = vmatprep.subr.mxu0 0.0
    %803 = vmatpush1.msra.mxu0 %v729
    %804 = vmatprep.subr.mxu0 0.0
    %805 = vmatpush1.msra.mxu0 %v724
    %806 = vmatprep.subr.mxu0 0.0
    %807 = vmatpush1.msra.mxu0 %v719
    %808 = vmatprep.subr.mxu0 0.0
    %809 = vmatpush1.msra.mxu0 %v714
    %810 = vmatprep.subr.mxu0 0.0
    %811 = vmatpush1.msra.mxu0 %v709
    %812 = vmatprep.subr.mxu0 0.0
    %813 = vmatpush1.msra.mxu0 %v704
    %814 = vmatprep.subr.mxu0 0.0
    %815 = vmatpush2.msra.mxu0 0.0
    %816 = vmatprep.subr.mxu0 0.0
    %817 = vmatpush2.msra.mxu0 0.0
    %818 = vmatprep.subr.mxu0 0.0
    %819 = vmatpush2.msra.mxu0 0.0
    %820 = vmatprep.subr.mxu0 0.0
    %821 = vmatpush2.msra.mxu0 0.0
    %822 = vmatprep.subr.mxu0 0.0
    %823 = vmatpush2.msra.mxu0 0.0
    %824 = vmatprep.subr.mxu0 0.0
    %825 = vmatpush2.msra.mxu0 0.0
    %826 = vmatprep.subr.mxu0 0.0
    %827 = vmatpush2.msra.mxu0 0.0
    %828 = vmatprep.subr.mxu0 0.0
    %829 = vmatpush2.msra.mxu0 0.0
    %830 = vmatprep.subr.mxu0 0.0
    %831 = vmatpush2.msra.mxu0 0.0
    %832 = vmatprep.subr.mxu0 0.0
    %833 = vmatpush2.msra.mxu0 0.0
    %834 = vmatprep.subr.mxu0 0.0
    %835 = vmatpush2.msra.mxu0 0.0
    %836 = vmatprep.subr.mxu0 0.0
    %837 = vmatpush2.msra.mxu0 0.0
    %838 = vmatprep.subr.mxu0 0.0
    %839 = vmatpush2.msra.mxu0 0.0
    %840 = vmatprep.subr.mxu0 0.0
    %841 = vmatpush2.msra.mxu0 0.0
    %842 = vmatprep.subr.mxu0 0.0
    %843 = vmatpush2.msra.mxu0 0.0
    %844 = vmatprep.subr.mxu0 0.0
    %845 = vmatpush2.msra.mxu0 0.0
    %846 = vmatprep.mubr.f32.mxu0 0.0
    %847 = vmatmul.mubr.f32.gmra.mxu0 %v55
    %v848 = vpop.f32.mrf.mxu0
    %v849 = vadd.f32 0.0, %v848
    %v850 = vpop.f32.mrf.mxu0
    %851 = vmatprep.mubr.f32.mxu0 0.0
    %852 = vmatmul.mubr.f32.gmra.mxu0 %v56
    %v853 = vpop.f32.mrf.mxu0
    %v854 = vadd.f32 0.0, %v853
    %v855 = vpop.f32.mrf.mxu0
    %856 = vmatprep.mubr.f32.mxu0 0.0
    %857 = vmatmul.mubr.f32.gmra.mxu0 %v57
    %v858 = vpop.f32.mrf.mxu0
    %v859 = vadd.f32 0.0, %v858
    %v860 = vpop.f32.mrf.mxu0
    %861 = vmatprep.mubr.f32.mxu0 0.0
    %862 = vmatmul.mubr.f32.gmra.mxu0 %v58
    %v863 = vpop.f32.mrf.mxu0
    %v864 = vadd.f32 0.0, %v863
    %v865 = vpop.f32.mrf.mxu0
    %866 = vmatprep.mubr.f32.mxu0 0.0
    %867 = vmatmul.mubr.f32.gmra.mxu0 %v59
    %v868 = vpop.f32.mrf.mxu0
    %v869 = vadd.f32 0.0, %v868
    %v870 = vpop.f32.mrf.mxu0
    %871 = vmatprep.mubr.f32.mxu0 0.0
    %872 = vmatmul.mubr.f32.gmra.mxu0 %v60
    %v873 = vpop.f32.mrf.mxu0
    %v874 = vadd.f32 0.0, %v873
    %v875 = vpop.f32.mrf.mxu0
    %876 = vmatprep.mubr.f32.mxu0 0.0
    %877 = vmatmul.mubr.f32.gmra.mxu0 %v61
    %v878 = vpop.f32.mrf.mxu0
    %v879 = vadd.f32 0.0, %v878
    %v880 = vpop.f32.mrf.mxu0
    %881 = vmatprep.mubr.f32.mxu0 0.0
    %882 = vmatmul.mubr.f32.gmra.mxu0 %v62
    %v883 = vpop.f32.mrf.mxu0
    %v884 = vadd.f32 0.0, %v883
    %v885 = vpop.f32.mrf.mxu0
    %886 = vmatprep.mubr.f32.mxu0 0.0
    %887 = vmatmul.mubr.f32.gmra.mxu0 %v63
    %v888 = vpop.f32.mrf.mxu0
    %v889 = vadd.f32 0.0, %v888
    %v890 = vpop.f32.mrf.mxu0
    %891 = vmatprep.mubr.f32.mxu0 0.0
    %892 = vmatmul.mubr.f32.gmra.mxu0 %v64
    %v893 = vpop.f32.mrf.mxu0
    %v894 = vadd.f32 0.0, %v893
    %v895 = vpop.f32.mrf.mxu0
    %896 = vmatprep.mubr.f32.mxu0 0.0
    %897 = vmatmul.mubr.f32.gmra.mxu0 %v65
    %v898 = vpop.f32.mrf.mxu0
    %v899 = vadd.f32 0.0, %v898
    %v900 = vpop.f32.mrf.mxu0
    %901 = vmatprep.mubr.f32.mxu0 0.0
    %902 = vmatmul.mubr.f32.gmra.mxu0 %v66
    %v903 = vpop.f32.mrf.mxu0
    %v904 = vadd.f32 0.0, %v903
    %v905 = vpop.f32.mrf.mxu0
    %906 = vmatprep.mubr.f32.mxu0 0.0
    %907 = vmatmul.mubr.f32.gmra.mxu0 %v67
    %v908 = vpop.f32.mrf.mxu0
    %v909 = vadd.f32 0.0, %v908
    %v910 = vpop.f32.mrf.mxu0
    %911 = vmatprep.mubr.f32.mxu0 0.0
    %912 = vmatmul.mubr.f32.gmra.mxu0 %v68
    %v913 = vpop.f32.mrf.mxu0
    %v914 = vadd.f32 0.0, %v913
    %v915 = vpop.f32.mrf.mxu0
    %916 = vmatprep.mubr.f32.mxu0 0.0
    %917 = vmatmul.mubr.f32.gmra.mxu0 %v69
    %v918 = vpop.f32.mrf.mxu0
    %v919 = vadd.f32 0.0, %v918
    %v920 = vpop.f32.mrf.mxu0
    %921 = vmatprep.mubr.f32.mxu0 0.0
    %922 = vmatmul.mubr.f32.gmra.mxu0 %v70
    %v923 = vpop.f32.mrf.mxu0
    %v924 = vadd.f32 0.0, %v923
    %v925 = vpop.f32.mrf.mxu0
    %926 = vdwg.mxu0
    %927 = vmatprep.subr.mxu0 0.0
    %928 = vmatpush1.msra.mxu0 %v924
    %929 = vmatprep.subr.mxu0 0.0
    %930 = vmatpush1.msra.mxu0 %v919
    %931 = vmatprep.subr.mxu0 0.0
    %932 = vmatpush1.msra.mxu0 %v914
    %933 = vmatprep.subr.mxu0 0.0
    %934 = vmatpush1.msra.mxu0 %v909
    %935 = vmatprep.subr.mxu0 0.0
    %936 = vmatpush1.msra.mxu0 %v904
    %937 = vmatprep.subr.mxu0 0.0
    %938 = vmatpush1.msra.mxu0 %v899
    %939 = vmatprep.subr.mxu0 0.0
    %940 = vmatpush1.msra.mxu0 %v894
    %941 = vmatprep.subr.mxu0 0.0
    %942 = vmatpush1.msra.mxu0 %v889
    %943 = vmatprep.subr.mxu0 0.0
    %944 = vmatpush1.msra.mxu0 %v884
    %945 = vmatprep.subr.mxu0 0.0
    %946 = vmatpush1.msra.mxu0 %v879
    %947 = vmatprep.subr.mxu0 0.0
    %948 = vmatpush1.msra.mxu0 %v874
    %949 = vmatprep.subr.mxu0 0.0
    %950 = vmatpush1.msra.mxu0 %v869
    %951 = vmatprep.subr.mxu0 0.0
    %952 = vmatpush1.msra.mxu0 %v864
    %953 = vmatprep.subr.mxu0 0.0
    %954 = vmatpush1.msra.mxu0 %v859
    %955 = vmatprep.subr.mxu0 0.0
    %956 = vmatpush1.msra.mxu0 %v854
    %957 = vmatprep.subr.mxu0 0.0
    %958 = vmatpush1.msra.mxu0 %v849
    %959 = vmatprep.subr.mxu0 0.0
    %960 = vmatpush2.msra.mxu0 0.0
    %961 = vmatprep.subr.mxu0 0.0
    %962 = vmatpush2.msra.mxu0 0.0
    %963 = vmatprep.subr.mxu0 0.0
    %964 = vmatpush2.msra.mxu0 0.0
    %965 = vmatprep.subr.mxu0 0.0
    %966 = vmatpush2.msra.mxu0 0.0
    %967 = vmatprep.subr.mxu0 0.0
    %968 = vmatpush2.msra.mxu0 0.0
    %969 = vmatprep.subr.mxu0 0.0
    %970 = vmatpush2.msra.mxu0 0.0
    %971 = vmatprep.subr.mxu0 0.0
    %972 = vmatpush2.msra.mxu0 0.0
    %973 = vmatprep.subr.mxu0 0.0
    %974 = vmatpush2.msra.mxu0 0.0
    %975 = vmatprep.subr.mxu0 0.0
    %976 = vmatpush2.msra.mxu0 0.0
    %977 = vmatprep.subr.mxu0 0.0
    %978 = vmatpush2.msra.mxu0 0.0
    %979 = vmatprep.subr.mxu0 0.0
    %980 = vmatpush2.msra.mxu0 0.0
    %981 = vmatprep.subr.mxu0 0.0
    %982 = vmatpush2.msra.mxu0 0.0
    %983 = vmatprep.subr.mxu0 0.0
    %984 = vmatpush2.msra.mxu0 0.0
    %985 = vmatprep.subr.mxu0 0.0
    %986 = vmatpush2.msra.mxu0 0.0
    %987 = vmatprep.subr.mxu0 0.0
    %988 = vmatpush2.msra.mxu0 0.0
    %989 = vmatprep.subr.mxu0 0.0
    %990 = vmatpush2.msra.mxu0 0.0
    %991 = vmatprep.mubr.f32.mxu0 0.0
    %992 = vmatmul.mubr.f32.gmra.mxu0 %v71
    %v993 = vpop.f32.mrf.mxu0
    %v994 = vadd.f32 0.0, %v993
    %v995 = vpop.f32.mrf.mxu0
    %996 = vmatprep.mubr.f32.mxu0 0.0
    %997 = vmatmul.mubr.f32.gmra.mxu0 %v72
    %v998 = vpop.f32.mrf.mxu0
    %v999 = vadd.f32 0.0, %v998
    %v1000 = vpop.f32.mrf.mxu0
    %1001 = vmatprep.mubr.f32.mxu0 0.0
    %1002 = vmatmul.mubr.f32.gmra.mxu0 %v73
    %v1003 = vpop.f32.mrf.mxu0
    %v1004 = vadd.f32 0.0, %v1003
    %v1005 = vpop.f32.mrf.mxu0
    %1006 = vmatprep.mubr.f32.mxu0 0.0
    %1007 = vmatmul.mubr.f32.gmra.mxu0 %v74
    %v1008 = vpop.f32.mrf.mxu0
    %v1009 = vadd.f32 0.0, %v1008
    %v1010 = vpop.f32.mrf.mxu0
    %1011 = vmatprep.mubr.f32.mxu0 0.0
    %1012 = vmatmul.mubr.f32.gmra.mxu0 %v75
    %v1013 = vpop.f32.mrf.mxu0
    %v1014 = vadd.f32 0.0, %v1013
    %v1015 = vpop.f32.mrf.mxu0
    %1016 = vmatprep.mubr.f32.mxu0 0.0
    %1017 = vmatmul.mubr.f32.gmra.mxu0 %v76
    %v1018 = vpop.f32.mrf.mxu0
    %v1019 = vadd.f32 0.0, %v1018
    %v1020 = vpop.f32.mrf.mxu0
    %1021 = vmatprep.mubr.f32.mxu0 0.0
    %1022 = vmatmul.mubr.f32.gmra.mxu0 %v77
    %v1023 = vpop.f32.mrf.mxu0
    %v1024 = vadd.f32 0.0, %v1023
    %v1025 = vpop.f32.mrf.mxu0
    %1026 = vmatprep.mubr.f32.mxu0 0.0
    %1027 = vmatmul.mubr.f32.gmra.mxu0 %v78
    %v1028 = vpop.f32.mrf.mxu0
    %v1029 = vadd.f32 0.0, %v1028
    %v1030 = vpop.f32.mrf.mxu0
    %1031 = vmatprep.mubr.f32.mxu0 0.0
    %1032 = vmatmul.mubr.f32.gmra.mxu0 %v79
    %v1033 = vpop.f32.mrf.mxu0
    %v1034 = vadd.f32 0.0, %v1033
    %v1035 = vpop.f32.mrf.mxu0
    %1036 = vmatprep.mubr.f32.mxu0 0.0
    %1037 = vmatmul.mubr.f32.gmra.mxu0 %v80
    %v1038 = vpop.f32.mrf.mxu0
    %v1039 = vadd.f32 0.0, %v1038
    %v1040 = vpop.f32.mrf.mxu0
    %1041 = vmatprep.mubr.f32.mxu0 0.0
    %1042 = vmatmul.mubr.f32.gmra.mxu0 %v81
    %v1043 = vpop.f32.mrf.mxu0
    %v1044 = vadd.f32 0.0, %v1043
    %v1045 = vpop.f32.mrf.mxu0
    %1046 = vmatprep.mubr.f32.mxu0 0.0
    %1047 = vmatmul.mubr.f32.gmra.mxu0 %v82
    %v1048 = vpop.f32.mrf.mxu0
    %v1049 = vadd.f32 0.0, %v1048
    %v1050 = vpop.f32.mrf.mxu0
    %1051 = vmatprep.mubr.f32.mxu0 0.0
    %1052 = vmatmul.mubr.f32.gmra.mxu0 %v83
    %v1053 = vpop.f32.mrf.mxu0
    %v1054 = vadd.f32 0.0, %v1053
    %v1055 = vpop.f32.mrf.mxu0
    %1056 = vmatprep.mubr.f32.mxu0 0.0
    %1057 = vmatmul.mubr.f32.gmra.mxu0 %v84
    %v1058 = vpop.f32.mrf.mxu0
    %v1059 = vadd.f32 0.0, %v1058
    %v1060 = vpop.f32.mrf.mxu0
    %1061 = vmatprep.mubr.f32.mxu0 0.0
    %1062 = vmatmul.mubr.f32.gmra.mxu0 %v85
    %v1063 = vpop.f32.mrf.mxu0
    %v1064 = vadd.f32 0.0, %v1063
    %v1065 = vpop.f32.mrf.mxu0
    %1066 = vmatprep.mubr.f32.mxu0 0.0
    %1067 = vmatmul.mubr.f32.gmra.mxu0 %v86
    %v1068 = vpop.f32.mrf.mxu0
    %v1069 = vadd.f32 0.0, %v1068
    %v1070 = vpop.f32.mrf.mxu0
    %1071 = vdwg.mxu0
    %1072 = vst [vmem:[#allocation7] sm:$0xff] %v994
    %1073 = vst [vmem:[#allocation7 + $0x8] sm:$0xff] %v999
    %1074 = vst [vmem:[#allocation7 + $0x10] sm:$0xff] %v1004
    %1075 = vst [vmem:[#allocation7 + $0x18] sm:$0xff] %v1009
    %1076 = vst [vmem:[#allocation7 + $0x20] sm:$0xff] %v1014
    %1077 = vst [vmem:[#allocation7 + $0x28] sm:$0xff] %v1019
    %1078 = vst [vmem:[#allocation7 + $0x30] sm:$0xff] %v1024
    %1079 = vst [vmem:[#allocation7 + $0x38] sm:$0xff] %v1029
    %1080 = vst [vmem:[#allocation7 + $0x40] sm:$0xff] %v1034
    %1081 = vst [vmem:[#allocation7 + $0x48] sm:$0xff] %v1039
    %1082 = vst [vmem:[#allocation7 + $0x50] sm:$0xff] %v1044
    %1083 = vst [vmem:[#allocation7 + $0x58] sm:$0xff] %v1049
    %1084 = vst [vmem:[#allocation7 + $0x60] sm:$0xff] %v1054
    %1085 = vst [vmem:[#allocation7 + $0x68] sm:$0xff] %v1059
    %1086 = vst [vmem:[#allocation7 + $0x70] sm:$0xff] %v1064
    %1087 = vst [vmem:[#allocation7 + $0x78] sm:$0xff] %v1069
    // Predicated region
    $region38: #{tpu_custom_call.1} parent=1 // pred_check
      _
    $region39: #{tpu_custom_call.1} parent=1 // pred_check_branch
      %1089 = sbr.rel (0) target = $region41
    $region40: #{tpu_custom_call.1} parent=1 // pred_region
      %s1091 = ssub.s32 2048, 2048
      %1092 = vsyncadd [#allocation4], %s1091
      %s1093 = sshll.u32 [#allocation7], 4
      %s1094 = int_to_ptr.vmem [resolvable:$true] %s1093
      %1099 = dma.vmem_to_hbm [thread:$0]  %s1094, 2048, %s7, [#allocation4], 128, 128, 8
    $region41: #{tpu_custom_call.1} parent=1 // pred_fallthru
      _
    // Predicated region
    $region42: #{tpu_custom_call.1} parent=1 // pred_check
      _
    $region43: #{tpu_custom_call.1} parent=1 // pred_check_branch
      %1101 = sbr.rel (0) target = $region45
    $region44: #{tpu_custom_call.1} parent=1 // pred_region
      %1102 = dma.done [#allocation4], 2048
    $region45: #{tpu_custom_call.1} parent=1 // pred_fallthru
      _
    %1103 = vsyncpa [#allocation3], 1
    %1104 = vsyncpa [#allocation6], 1
    %1105 = vsyncpa [#allocation4], 1

</llo_original>
